<compile_context>
chip_gen: v7x
topology: tpu7x:2x2x1
jax: 0.10.0
libtpu: 0.0.40
codegen_flags: <defaults>
</compile_context>

<pallas_src>
import functools

import jax
import jax.numpy as jnp
from jax import lax
from jax.experimental import pallas as pl
from jax.experimental.pallas import tpu as pltpu

# ~2 MiB per x block: measured mem-bound data shows 1-2 MiB tiles already reach
# ~85% of HBM roofline; double-buffered blocks + elementwise temporaries stay
# comfortably inside the scoped VMEM limit on v5e / v6e / v7x (v7x is the
# tightest at 64 MiB physical).
_MAX_BLOCK_BYTES = 2 * 1024 * 1024
# Keep at least this many batch tiles (when N allows) so the BlockSpec pipeline
# overlaps DMA with compute and both v7x TensorCores get sharded work.
_MIN_GRID_STEPS = 8


def _round_up(v, m):
    return ((v + m - 1) // m) * m


def _label_smoothing_kernel(x_ref, t_ref, o_ref, m_sc, s_sc, w_sc, *,
                            confidence, smoothing, n_rows, n_cols,
                            tile_b, tile_c, ragged_rows, ragged_cols):
    i = pl.program_id(0)          # batch tile ("parallel")
    j = pl.program_id(1)          # class tile ("arbitrary", online lse)

    @pl.when(j == 0)
    def _():
        m_sc[...] = jnp.full_like(m_sc, -jnp.inf)
        s_sc[...] = jnp.zeros_like(s_sc)
        w_sc[...] = jnp.zeros_like(w_sc)

    x = x_ref[...].astype(jnp.float32)                        # (TB, TC)
    t = t_ref[...]                                            # (TB, 1) int32

    # (1, TC) iota broadcast against the (TB, 1) targets by the compare; no
    # full (TB, TC) int32 temporary is materialized.
    col = j * tile_c + lax.broadcasted_iota(jnp.int32, (1, tile_c), 1)

    row = None
    if ragged_rows:
        # Padded rows of the last batch tile may hold garbage (Inf/NaN); the
        # select keeps them out of exp/log entirely.
        row = i * tile_b + lax.broadcasted_iota(jnp.int32, (tile_b, 1), 0)
        x = jnp.where(row < n_rows, x, 0.0)

    if ragged_cols:
        col_ok = col < n_cols
        x_w = jnp.where(col_ok, x, 0.0)        # excluded from weighted sum
        x_lse = jnp.where(col_ok, x, -jnp.inf)  # excluded from logsumexp
    else:
        x_w = x
        x_lse = x

    # Fused reduction weights:
    #   sum_c(x * w) == confidence * x[target] + smoothing * mean(x)
    base_w = smoothing / n_cols
    w = jnp.where(col == t, base_w + confidence, base_w)      # (TB, TC) f32

    # Online (numerically stable) logsumexp across class tiles; per block this
    # is 3 lane reductions: max, sum(exp), fused weighted sum.
    # TODO(synk): if a bundle dump shows the XLU/vex slot saturated at small C,
    # offload the two sum-type reductions to the idle MXU via jnp.dot against a
    # ones column (mind f32 matmul precision when doing so).
    m_new = jnp.maximum(m_sc[...],
                        jnp.max(x_lse, axis=-1, keepdims=True))   # (TB, 1)
    alpha = jnp.exp(m_sc[...] - m_new)
    s_sc[...] = alpha * s_sc[...] + jnp.sum(jnp.exp(x_lse - m_new),
                                            axis=-1, keepdims=True)
    w_sc[...] = w_sc[...] + jnp.sum(x_w * w, axis=-1, keepdims=True)
    m_sc[...] = m_new

    @pl.when(j == pl.num_programs(1) - 1)
    def _():
        # logprobs are never materialized:
        #   loss = lse - (confidence * x[target] + smoothing * mean(x))
        lse = m_sc[...] + jnp.log(s_sc[...])
        loss = lse - w_sc[...]                                    # (TB, 1)
        if ragged_rows:
            loss = jnp.where(row < n_rows, loss, 0.0)
        # One partial sum per batch tile, broadcast into a lane-dense (8, 128)
        # block so the store is a plain unmasked vst and the batch axis can
        # stay "parallel" (no serial scalar accumulator).
        o_ref[...] = jnp.broadcast_to(jnp.sum(loss),
                                      o_ref.shape).astype(o_ref.dtype)


def label_smoothing_loss(x, target, smoothing=0.1, *, tile_b=None, tile_c=None):
    """x: (N, C) float logits, target: (N,) int labels. Returns scalar loss."""
    N, C = x.shape
    confidence = 1.0 - smoothing
    itemsize = jnp.dtype(x.dtype).itemsize
    row_mult = 16 if itemsize == 2 else 8       # bf16 min tile is (16, 128)

    # ---- class tiling (inner "arbitrary" axis, online logsumexp) ----
    if tile_c is None:
        if C * row_mult * itemsize <= _MAX_BLOCK_BYTES:
            tile_c = C                           # single class tile
        else:
            tile_c = max(128, (_MAX_BLOCK_BYTES // (row_mult * itemsize))
                         // 128 * 128)
    if tile_c >= C:
        tile_c = C
    else:
        tile_c = max(128, (tile_c // 128) * 128)  # (8,128) block constraint
    num_c_tiles = pl.cdiv(C, tile_c)
    ragged_cols = (C % tile_c) != 0

    # ---- batch tiling (outer "parallel" axis) ----
    if tile_b is None:
        if N <= row_mult:
            tile_b = N                           # single full-extent block
        else:
            cap = max(row_mult,
                      (_MAX_BLOCK_BYTES // (tile_c * itemsize))
                      // row_mult * row_mult)
            # At least _MIN_GRID_STEPS batch tiles (when N allows), balanced so
            # a ragged last tile does not burn a nearly-empty block of compute.
            want = _round_up(pl.cdiv(N, _MIN_GRID_STEPS), row_mult)
            tile_b = max(row_mult, min(cap, want))
            nb = pl.cdiv(N, tile_b)
            tile_b = max(row_mult,
                         min(tile_b, _round_up(pl.cdiv(N, nb), row_mult)))
    elif tile_b < N:
        tile_b = max(row_mult, _round_up(tile_b, row_mult))
    num_b_tiles = pl.cdiv(N, tile_b)
    ragged_rows = (N % tile_b) != 0

    t2d = target.astype(jnp.int32).reshape(N, 1)

    kernel = functools.partial(
        _label_smoothing_kernel,
        confidence=float(confidence),
        smoothing=float(smoothing),
        n_rows=N,
        n_cols=C,
        tile_b=tile_b,
        tile_c=tile_c,
        ragged_rows=ragged_rows,
        ragged_cols=ragged_cols,
    )

    partials = pl.pallas_call(
        kernel,
        out_shape=jax.ShapeDtypeStruct((num_b_tiles, 8, 128), jnp.float32),
        grid_spec=pltpu.PrefetchScalarGridSpec(
            num_scalar_prefetch=0,
            grid=(num_b_tiles, num_c_tiles),
            in_specs=[
                pl.BlockSpec((tile_b, tile_c), lambda i, j: (i, j)),
                pl.BlockSpec((tile_b, 1), lambda i, j: (i, 0)),
            ],
            out_specs=pl.BlockSpec((1, 8, 128), lambda i, j: (i, 0, 0)),
            scratch_shapes=[
                pltpu.VMEM((tile_b, 1), jnp.float32),   # running max
                pltpu.VMEM((tile_b, 1), jnp.float32),   # running sum(exp)
                pltpu.VMEM((tile_b, 1), jnp.float32),   # running weighted sum
            ],
        ),
        compiler_params=pltpu.CompilerParams(
            dimension_semantics=("parallel", "arbitrary"),
            vmem_limit_bytes=32 * 1024 * 1024,
        ),
    )(x, t2d)

    # Tiny final reduction over the per-tile partials in plain JAX.
    return jnp.sum(partials[:, 0, 0]) / N


def _reference(x, target, smoothing):
    confidence = 1.0 - smoothing
    logprobs = jax.nn.log_softmax(x.astype(jnp.float32), axis=-1)
    nll = -jnp.take_along_axis(logprobs, target[:, None], axis=-1)[:, 0]
    smooth = -jnp.mean(logprobs, axis=-1)
    return jnp.mean(confidence * nll + smoothing * smooth)


if __name__ == "__main__":
    key = jax.random.PRNGKey(0)
    smoothing = 0.1

    def check(x, target, atol, rtol, **kw):
        loss = jax.block_until_ready(label_smoothing_loss(x, target, smoothing, **kw))
        ref = _reference(x, target, smoothing)
        assert jnp.allclose(loss, ref, atol=atol, rtol=rtol), (loss, ref)

    # 1) Even case: batch divisible by the tile, single class tile.
    kx, kt = jax.random.split(key)
    x = jax.random.normal(kx, (16, 128), dtype=jnp.float32)
    t = jax.random.randint(kt, (16,), 0, 128, dtype=jnp.int32)
    check(x, t, 1e-5, 1e-5)

    # 2) Ragged batch: exercises the row-validity mask.
    kx2, kt2 = jax.random.split(kt)
    x2 = jax.random.normal(kx2, (20, 128), dtype=jnp.float32)
    t2 = jax.random.randint(kt2, (20,), 0, 128, dtype=jnp.int32)
    check(x2, t2, 1e-5, 1e-5)

    # 3) Class-tiled path (online logsumexp over 3 class tiles).
    kx3, kt3 = jax.random.split(kt2)
    x3 = jax.random.normal(kx3, (16, 384), dtype=jnp.float32)
    t3 = jax.random.randint(kt3, (16,), 0, 384, dtype=jnp.int32)
    check(x3, t3, 1e-4, 1e-4, tile_c=128)

    # 4) Ragged rows AND ragged class columns.
    kx4, kt4 = jax.random.split(kt3)
    x4 = jax.random.normal(kx4, (12, 200), dtype=jnp.float32)
    t4 = jax.random.randint(kt4, (12,), 0, 200, dtype=jnp.int32)
    check(x4, t4, 1e-4, 1e-4, tile_c=128)

    # 5) bf16 logits path (halved HBM traffic; f32 math in-kernel).
    kx5, kt5 = jax.random.split(kt4)
    x5 = jax.random.normal(kx5, (32, 128), dtype=jnp.bfloat16)
    t5 = jax.random.randint(kt5, (32,), 0, 128, dtype=jnp.int32)
    check(x5, t5, 1e-4, 1e-4)

    print("KERNEL_OK")
</pallas_src>

<mosaic_0001>
module attributes {stable_mosaic.version = 11 : i64} {
  func.func @_label_smoothing_kernel(%arg0: i32, %arg1: i32, %arg2: memref<8x128xf32, #tpu.memory_space<vmem>>, %arg3: memref<8x1xi32, #tpu.memory_space<vmem>>, %arg4: memref<1x8x128xf32, #tpu.memory_space<vmem>>, %arg5: memref<8x1xf32, #tpu.memory_space<vmem>>, %arg6: memref<8x1xf32, #tpu.memory_space<vmem>>, %arg7: memref<8x1xf32, #tpu.memory_space<vmem>>) attributes {dimension_semantics = [#tpu.dimension_semantics<parallel>, #tpu.dimension_semantics<arbitrary>], iteration_bounds = array<i64: 2, 1>, scalar_prefetch = 0 : i64, scratch_operands = 3 : i64, tpu.core_type = #tpu.core_type<tc>, window_params = [{transform_indices = @transform_0, window_bounds = array<i64: 8, 128>}, {transform_indices = @transform_1, window_bounds = array<i64: 8, 1>}, {transform_indices = @transform_2, window_bounds = array<i64: 1, 8, 128>}]} {
    %c0_i32 = arith.constant 0 : i32
    %0 = arith.cmpi eq, %arg1, %c0_i32 : i32
    %1 = arith.extui %0 : i1 to i32
    %c0_i32_0 = arith.constant 0 : i32
    %2 = arith.cmpi ne, %1, %c0_i32_0 : i32
    scf.if %2 {
      %cst_24 = arith.constant 0xFF800000 : f32
      %41 = vector.broadcast %cst_24 : f32 to vector<8x1xf32>
      %c0_25 = arith.constant 0 : index
      %c0_26 = arith.constant 0 : index
      %42 = vector.load %arg5[%c0_25, %c0_26] : memref<8x1xf32, #tpu.memory_space<vmem>>, vector<8x1xf32>
      tpu.vector_store %arg5[%c0_25, %c0_26], %41 {strides = array<i32>} : memref<8x1xf32, #tpu.memory_space<vmem>>, vector<8x1xf32>,
      %cst_27 = arith.constant 0.000000e+00 : f32
      %43 = vector.broadcast %cst_27 : f32 to vector<8x1xf32>
      %c0_28 = arith.constant 0 : index
      %c0_29 = arith.constant 0 : index
      %44 = vector.load %arg6[%c0_28, %c0_29] : memref<8x1xf32, #tpu.memory_space<vmem>>, vector<8x1xf32>
      tpu.vector_store %arg6[%c0_28, %c0_29], %43 {strides = array<i32>} : memref<8x1xf32, #tpu.memory_space<vmem>>, vector<8x1xf32>,
      %cst_30 = arith.constant 0.000000e+00 : f32
      %45 = vector.broadcast %cst_30 : f32 to vector<8x1xf32>
      %c0_31 = arith.constant 0 : index
      %c0_32 = arith.constant 0 : index
      %46 = vector.load %arg7[%c0_31, %c0_32] : memref<8x1xf32, #tpu.memory_space<vmem>>, vector<8x1xf32>
      tpu.vector_store %arg7[%c0_31, %c0_32], %45 {strides = array<i32>} : memref<8x1xf32, #tpu.memory_space<vmem>>, vector<8x1xf32>,
    } else {
    }
    %c0 = arith.constant 0 : index
    %c0_1 = arith.constant 0 : index
    %3 = vector.load %arg2[%c0, %c0_1] : memref<8x128xf32, #tpu.memory_space<vmem>>, vector<8x128xf32>
    %c0_2 = arith.constant 0 : index
    %c0_3 = arith.constant 0 : index
    %4 = vector.load %arg3[%c0_2, %c0_3] : memref<8x1xi32, #tpu.memory_space<vmem>>, vector<8x1xi32>
    %c128_i32 = arith.constant 128 : i32
    %5 = arith.muli %arg1, %c128_i32 : i32
    %6 = tpu.iota {dimensions = array<i32: 1>} : vector<1x128xi32>
    %7 = vector.broadcast %5 : i32 to vector<1x128xi32>
    %8 = arith.addi %7, %6 : vector<1x128xi32>
    %9 = vector.broadcast %8 : vector<1x128xi32> to vector<8x128xi32>
    %10 = vector.broadcast %4 : vector<8x1xi32> to vector<8x128xi32>
    %11 = arith.cmpi eq, %9, %10 : vector<8x128xi32>
    %cst = arith.constant 0.900781273 : f32
    %cst_4 = arith.constant 7.812500e-04 : f32
    %12 = vector.broadcast %cst : f32 to vector<8x128xf32>
    %13 = vector.broadcast %cst_4 : f32 to vector<8x128xf32>
    %14 = arith.select %11, %12, %13 : vector<8x128xi1>, vector<8x128xf32>
    %c0_5 = arith.constant 0 : index
    %c0_6 = arith.constant 0 : index
    %15 = vector.load %arg5[%c0_5, %c0_6] : memref<8x1xf32, #tpu.memory_space<vmem>>, vector<8x1xf32>
    %cst_7 = arith.constant dense<0xFF800000> : vector<8xf32>
    %16 = vector.multi_reduction <maximumf>, %3, %cst_7 [1] : vector<8x128xf32> to vector<8xf32>
    %17 = vector.shape_cast %16 : vector<8xf32> to vector<8x1xf32>
    %18 = arith.maximumf %15, %17 : vector<8x1xf32>
    %c0_8 = arith.constant 0 : index
    %c0_9 = arith.constant 0 : index
    %19 = vector.load %arg5[%c0_8, %c0_9] : memref<8x1xf32, #tpu.memory_space<vmem>>, vector<8x1xf32>
    %20 = arith.subf %19, %18 : vector<8x1xf32>
    %21 = math.exp %20 : vector<8x1xf32>
    %c0_10 = arith.constant 0 : index
    %c0_11 = arith.constant 0 : index
    %22 = vector.load %arg6[%c0_10, %c0_11] : memref<8x1xf32, #tpu.memory_space<vmem>>, vector<8x1xf32>
    %23 = arith.mulf %21, %22 : vector<8x1xf32>
    %24 = vector.broadcast %18 : vector<8x1xf32> to vector<8x128xf32>
    %25 = arith.subf %3, %24 : vector<8x128xf32>
    %26 = math.exp %25 : vector<8x128xf32>
    %cst_12 = arith.constant dense<0.000000e+00> : vector<8xf32>
    %27 = vector.multi_reduction <add>, %26, %cst_12 [1] : vector<8x128xf32> to vector<8xf32>
    %28 = vector.shape_cast %27 : vector<8xf32> to vector<8x1xf32>
    %29 = arith.addf %23, %28 : vector<8x1xf32>
    %c0_13 = arith.constant 0 : index
    %c0_14 = arith.constant 0 : index
    %30 = vector.load %arg6[%c0_13, %c0_14] : memref<8x1xf32, #tpu.memory_space<vmem>>, vector<8x1xf32>
    tpu.vector_store %arg6[%c0_13, %c0_14], %29 {strides = array<i32>} : memref<8x1xf32, #tpu.memory_space<vmem>>, vector<8x1xf32>,
    %c0_15 = arith.constant 0 : index
    %c0_16 = arith.constant 0 : index
    %31 = vector.load %arg7[%c0_15, %c0_16] : memref<8x1xf32, #tpu.memory_space<vmem>>, vector<8x1xf32>
    %32 = arith.mulf %3, %14 : vector<8x128xf32>
    %cst_17 = arith.constant dense<0.000000e+00> : vector<8xf32>
    %33 = vector.multi_reduction <add>, %32, %cst_17 [1] : vector<8x128xf32> to vector<8xf32>
    %34 = vector.shape_cast %33 : vector<8xf32> to vector<8x1xf32>
    %35 = arith.addf %31, %34 : vector<8x1xf32>
    %c0_18 = arith.constant 0 : index
    %c0_19 = arith.constant 0 : index
    %36 = vector.load %arg7[%c0_18, %c0_19] : memref<8x1xf32, #tpu.memory_space<vmem>>, vector<8x1xf32>
    tpu.vector_store %arg7[%c0_18, %c0_19], %35 {strides = array<i32>} : memref<8x1xf32, #tpu.memory_space<vmem>>, vector<8x1xf32>,
    %c0_20 = arith.constant 0 : index
    %c0_21 = arith.constant 0 : index
    %37 = vector.load %arg5[%c0_20, %c0_21] : memref<8x1xf32, #tpu.memory_space<vmem>>, vector<8x1xf32>
    tpu.vector_store %arg5[%c0_20, %c0_21], %18 {strides = array<i32>} : memref<8x1xf32, #tpu.memory_space<vmem>>, vector<8x1xf32>,
    %c0_i32_22 = arith.constant 0 : i32
    %38 = arith.cmpi eq, %arg1, %c0_i32_22 : i32
    %39 = arith.extui %38 : i1 to i32
    %c0_i32_23 = arith.constant 0 : i32
    %40 = arith.cmpi ne, %39, %c0_i32_23 : i32
    scf.if %40 {
      %c0_24 = arith.constant 0 : index
      %c0_25 = arith.constant 0 : index
      %41 = vector.load %arg5[%c0_24, %c0_25] : memref<8x1xf32, #tpu.memory_space<vmem>>, vector<8x1xf32>
      %c0_26 = arith.constant 0 : index
      %c0_27 = arith.constant 0 : index
      %42 = vector.load %arg6[%c0_26, %c0_27] : memref<8x1xf32, #tpu.memory_space<vmem>>, vector<8x1xf32>
      %43 = math.log %42 : vector<8x1xf32>
      %44 = arith.addf %41, %43 : vector<8x1xf32>
      %c0_28 = arith.constant 0 : index
      %c0_29 = arith.constant 0 : index
      %45 = vector.load %arg7[%c0_28, %c0_29] : memref<8x1xf32, #tpu.memory_space<vmem>>, vector<8x1xf32>
      %46 = arith.subf %44, %45 : vector<8x1xf32>
      %47 = vector.shape_cast %46 : vector<8x1xf32> to vector<1x8x1xf32>
      %cst_30 = arith.constant dense<0.000000e+00> : vector<1xf32>
      %48 = vector.multi_reduction <add>, %47, %cst_30 [1, 2] : vector<1x8x1xf32> to vector<1xf32>
      %49 = vector.shape_cast %48 : vector<1xf32> to vector<1x1x1xf32>
      %50 = vector.extract %49[0, 0, 0] : f32 from vector<1x1x1xf32>
      %51 = vector.broadcast %50 : f32 to vector<1x8x128xf32>
      %c0_31 = arith.constant 0 : index
      %c0_32 = arith.constant 0 : index
      %c0_33 = arith.constant 0 : index
      %52 = vector.load %arg4[%c0_31, %c0_32, %c0_33] : memref<1x8x128xf32, #tpu.memory_space<vmem>>, vector<1x8x128xf32>
      tpu.vector_store %arg4[%c0_31, %c0_32, %c0_33], %51 {strides = array<i32>} : memref<1x8x128xf32, #tpu.memory_space<vmem>>, vector<1x8x128xf32>,
    } else {
    }
    return
  }
  func.func @transform_0(%arg0: i32, %arg1: i32) -> (i32, i32) {
    %c0_i32 = arith.constant 0 : i32
    return %arg0, %arg1 : i32, i32
  }
  func.func @transform_1(%arg0: i32, %arg1: i32) -> (i32, i32) {
    %c0_i32 = arith.constant 0 : i32
    %c0_i32_0 = arith.constant 0 : i32
    return %arg0, %c0_i32 : i32, i32
  }
  func.func @transform_2(%arg0: i32, %arg1: i32) -> (i32, i32, i32) {
    %c0_i32 = arith.constant 0 : i32
    %c0_i32_0 = arith.constant 0 : i32
    %c0_i32_1 = arith.constant 0 : i32
    return %arg0, %c0_i32, %c0_i32_0 : i32, i32, i32
  }
}

</mosaic_0001>

<llo_original>
// kernel: tpu_custom_call.1
$region0: #{tpu_custom_call.1}
  #allocation0 [shape = 'u32[]', space=smem, size = 0x4, offset = 0x4, fixed_abs, tag = 'smem constant byte address 0x4 - core index']
  #allocation1 [shape = 'u32[144,128]{1,0:T(1,128)}', space=vmem, size = 0x12000, scoped, tag = 'internal scratch']
  #allocation2 [shape = 'f32[8,1]{1,0:T(8,128)}', space=vmem, size = 0x1000, scoped, tag = 'scratch operand']
  #allocation3 [shape = 'f32[8,1]{1,0:T(8,128)}', space=vmem, size = 0x1000, scoped, tag = 'scratch operand']
  #allocation4 [shape = 'f32[8,1]{1,0:T(8,128)}', space=vmem, size = 0x1000, scoped, tag = 'scratch operand']
  %s0 = inlined_call_operand.vmem [shape: f32[16,128], index: 0, kind: input, shape index: {}]
  %s1 = inlined_call_operand.vmem [shape: s32[16,1], index: 1, kind: input, shape index: {}]
  %s2 = inlined_call_operand.hbm [shape: f32[2,8,128], index: 2, kind: output, shape index: {}]
  %s3 = sld [smem:[#allocation0]]
  $region49: #{tpu_custom_call.1} parent=0
    _
  %s5 = ssub.s32 1, %s3
  %s6 = scalar_select 0, %s5, %s3
  $region1: #{tpu_custom_call.1} parent=0
    #allocation5 [shape = 'u8[8192]{0}', space=vmem, size = 0x2000, scoped, tag = 'output window, operand 0']
    #allocation6 [shape = 's32[2]{0}', space=sflag, size = 0x8, scoped, tag = 'scoped memory for tpu_custom_call.1']
    %7 = vsyncpa [#allocation6], 0
    %s8 = scalar_lea.sflag [#allocation6], 1
    %9 = vsyncpa %s8, 0
    loop: start=0, step=1, limit=4
    $region2: #{tpu_custom_call.1} parent=1 // loop_pre_header
      _
    $region3: #{tpu_custom_call.1} parent=1 // loop_header
      %s11 = sphi 0, %s15
      %p12 = scmp.ge.s32.totalorder %s11, 4
      %s18 = sphi 0, %s30
      %s19 = sphi 0, %s26
      %s20 = sphi 0, %s18
      %s21 = sphi 0, %s19
      %s22 = sphi 0, %s20
      %s23 = sphi 0, %s21
      %s35 = sphi 0, %s37
      %s38 = sphi 0, %s35
      %s39 = sphi 0, %s38
      %s55 = sphi 0, %s39
      %s61 = sphi 0, %s63
      %s64 = sphi 0, %s61
      %s65 = sphi 0, %s64
      %s81 = sphi 0, %s65
      %s87 = sphi 0, %s89
      %s90 = sphi 0, %s87
      %s91 = sphi 0, %s90
      %s107 = sphi 0, %s91
    $region4: #{tpu_custom_call.1} parent=1 // loop_header_branch
      %14 = sbr.rel (%p12) target = $region8
    $region5: #{tpu_custom_call.1} parent=1 // loop_body
      %s16 = ssub.s32 %s11, 1
      %s17 = ssub.s32 %s11, 2
      %s24 = sadd.s32 1, %s19
      %p25 = scmp.ge.s32.totalorder %s24, 1
      %s26 = scalar_select %p25, 0, %s24
      %s27 = sadd.s32 1, %s18
      %s28 = scalar_select %p25, %s27, %s18
      %p29 = scmp.ge.s32.totalorder %s28, 2
      %s30 = scalar_select %p29, 0, %s28
      %s31 = ssub.s32 %s18, %s30
      %s32 = ssub.s32 %s19, %s26
      %s33 = sor.u32 %s31, %s32
      %p34 = scmp.eq.s32.totalorder %s33, 0
      %s36 = sadd.s32 %s35, 1
      %s37 = scalar_select %p34, %s35, %s36
      %p40 = pneg %p34
      %p41 = scmp.eq.s32.totalorder %s11, 1
      %p42 = por %p40, %p41
      %p43 = scmp.ne.s32.totalorder %s35, %s38
      %p44 = scmp.eq.s32.totalorder %s11, 0
      %p45 = por %p43, %p44
      %p46 = scmp.ne.s32.totalorder %s35, %s38
      %p47 = scmp.eq.s32.totalorder %s16, 1
      %p48 = por %p46, %p47
      %p49 = scmp.ne.s32.totalorder %s38, %s39
      %p50 = scmp.eq.s32.totalorder %s16, 0
      %p51 = por %p49, %p50
      %p52 = scmp.ne.s32.totalorder %s38, %s39
      %p53 = scmp.eq.s32.totalorder %s17, 1
      %p54 = por %p52, %p53
      %p56 = scmp.ne.s32.totalorder %s39, %s55
      %p57 = scmp.eq.s32.totalorder %s17, 0
      %p58 = por %p56, %p57
      %s59 = ssub.s32 %s18, %s30
      %p60 = scmp.eq.s32.totalorder %s59, 0
      %s62 = sadd.s32 %s61, 1
      %s63 = scalar_select %p60, %s61, %s62
      %p66 = pneg %p60
      %p67 = scmp.eq.s32.totalorder %s11, 1
      %p68 = por %p66, %p67
      %p69 = scmp.ne.s32.totalorder %s61, %s64
      %p70 = scmp.eq.s32.totalorder %s11, 0
      %p71 = por %p69, %p70
      %p72 = scmp.ne.s32.totalorder %s61, %s64
      %p73 = scmp.eq.s32.totalorder %s16, 1
      %p74 = por %p72, %p73
      %p75 = scmp.ne.s32.totalorder %s64, %s65
      %p76 = scmp.eq.s32.totalorder %s16, 0
      %p77 = por %p75, %p76
      %p78 = scmp.ne.s32.totalorder %s64, %s65
      %p79 = scmp.eq.s32.totalorder %s17, 1
      %p80 = por %p78, %p79
      %p82 = scmp.ne.s32.totalorder %s65, %s81
      %p83 = scmp.eq.s32.totalorder %s17, 0
      %p84 = por %p82, %p83
      %s85 = ssub.s32 %s18, %s30
      %p86 = scmp.eq.s32.totalorder %s85, 0
      %s88 = sadd.s32 %s87, 1
      %s89 = scalar_select %p86, %s87, %s88
      %p92 = pneg %p86
      %p93 = scmp.eq.s32.totalorder %s11, 1
      %p94 = por %p92, %p93
      %p95 = scmp.ne.s32.totalorder %s87, %s90
      %p96 = scmp.eq.s32.totalorder %s11, 0
      %p97 = por %p95, %p96
      %p98 = scmp.ne.s32.totalorder %s87, %s90
      %p99 = scmp.eq.s32.totalorder %s16, 1
      %p100 = por %p98, %p99
      %p101 = scmp.ne.s32.totalorder %s90, %s91
      %p102 = scmp.eq.s32.totalorder %s16, 0
      %p103 = por %p101, %p102
      %p104 = scmp.ne.s32.totalorder %s90, %s91
      %p105 = scmp.eq.s32.totalorder %s17, 1
      %p106 = por %p104, %p105
      %p108 = scmp.ne.s32.totalorder %s91, %s107
      %p109 = scmp.eq.s32.totalorder %s17, 0
      %p110 = por %p108, %p109
      %p111 = scmp.le.s32.totalorder 1, %s11
      %p112 = scmp.lt.s32.totalorder %s11, 3
      %p113 = pnand %p111, %p112
      %p114 = pneg %p113
      // Predicated region
      $region9: #{tpu_custom_call.1} parent=5 // pred_check
        _
      $region10: #{tpu_custom_call.1} parent=5 // pred_check_branch
        %116 = sbr.rel (%p113) target = $region12
      $region11: #{tpu_custom_call.1} parent=5 // pred_region
        %s117 = ssub.s32 %s11, 1
      $region12: #{tpu_custom_call.1} parent=5 // pred_fallthru
        _
      %p118 = scmp.lt.s32.totalorder %s11, 2
      // Predicated region
      $region13: #{tpu_custom_call.1} parent=5 // pred_check
        %p119 = pneg %p118
      $region14: #{tpu_custom_call.1} parent=5 // pred_check_branch
        %121 = sbr.rel (%p119) target = $region16
      $region15: #{tpu_custom_call.1} parent=5 // pred_region
        // Predicated region
        $region17: #{tpu_custom_call.1} parent=15 // pred_check
          %p122 = pneg %p45
        $region18: #{tpu_custom_call.1} parent=15 // pred_check_branch
          %124 = sbr.rel (%p122) target = $region20
        $region19: #{tpu_custom_call.1} parent=15 // pred_region
          %p125 = scmp.lt.s32.totalorder %s18, 1
          %s126 = scalar_select %p125, %s18, 1
          %p127 = scmp.lt.s32.totalorder %s19, 0
          %s128 = scalar_select %p127, %s19, 0
          %s129 = sadd.s32 %s128, %s126
          %s130 = smul.addr %s129, 8
          %s131 = scalar_lea.vmem %s0, %s130
        $region20: #{tpu_custom_call.1} parent=15 // pred_fallthru
          _
        // Predicated region
        $region21: #{tpu_custom_call.1} parent=15 // pred_check
          %p132 = pneg %p71
        $region22: #{tpu_custom_call.1} parent=15 // pred_check_branch
          %134 = sbr.rel (%p132) target = $region24
        $region23: #{tpu_custom_call.1} parent=15 // pred_region
          %p135 = scmp.lt.s32.totalorder %s18, 1
          %s136 = scalar_select %p135, %s18, 1
          %s137 = smul.addr %s136, 8
          %s138 = scalar_lea.vmem %s1, %s137
        $region24: #{tpu_custom_call.1} parent=15 // pred_fallthru
          _
      $region16: #{tpu_custom_call.1} parent=5 // pred_fallthru
        _
      %p139 = scmp.le.s32.totalorder 1, %s11
      %p140 = scmp.lt.s32.totalorder %s11, 3
      %p141 = pnand %p139, %p140
      %p142 = pneg %p141
      // Predicated region
      $region25: #{tpu_custom_call.1} parent=5 // pred_check
        _
      $region26: #{tpu_custom_call.1} parent=5 // pred_check_branch
        %144 = sbr.rel (%p141) target = $region28
      $region27: #{tpu_custom_call.1} parent=5 // pred_region
        %s145 = ssub.s32 %s11, 1
        %p146 = scmp.lt.s32.totalorder %s20, 1
        %s147 = scalar_select %p146, %s20, 1
        %p148 = scmp.lt.s32.totalorder %s21, 0
        %s149 = scalar_select %p148, %s21, 0
        %s150 = sadd.s32 %s149, %s147
        %s151 = smul.addr %s150, 8
        %s152 = scalar_lea.vmem %s0, %s151
        %p153 = pneg %p51
        %p154 = pneg %p48
        %p155 = scmp.lt.s32.totalorder %s20, 1
        %s156 = scalar_select %p155, %s20, 1
        %s157 = smul.addr %s156, 8
        %s158 = scalar_lea.vmem %s1, %s157
        %p159 = pneg %p77
        %p160 = pneg %p74
        %p161 = pneg %p103
        %p162 = pneg %p100
        %s163 = sand.u32 %s90, 1
        %s164 = scalar_lea.sflag [#allocation6], %s163
        %s165 = sand.u32 %s90, 1
        %s166 = smul.addr %s165, 8
        %s167 = scalar_lea.vmem [#allocation5], %s166
        %p168 = scmp.lt.s32.totalorder %s20, 1
        %s169 = scalar_select %p168, %s20, 1
        %p170 = scmp.lt.s32.totalorder %s21, 0
        %s171 = scalar_select %p170, %s21, 0
        %s172 = sadd.s32 %s171, %s169
        %s173 = smul.addr %s172, 8
        %s174 = scalar_lea.vmem %s0, %s173
        %p175 = scmp.lt.s32.totalorder %s20, 1
        %s176 = scalar_select %p175, %s20, 1
        %s177 = smul.addr %s176, 8
        %s178 = scalar_lea.vmem %s1, %s177
        %p179 = scmp.eq.s32.totalorder %s21, 0
        // Predicated region
        $region29: #{tpu_custom_call.1} parent=27 // pred_check
          %p180 = pneg %p179
        $region30: #{tpu_custom_call.1} parent=27 // pred_check_branch
          %182 = sbr.rel (%p180) target = $region32
        $region31: #{tpu_custom_call.1} parent=27 // pred_region
          %vm183 = vcmask 7168
          %184 = vst.msk [vmem:[#allocation2] sm:$0xff] %vm183, -inf
          %185 = vst.msk [vmem:[#allocation3] sm:$0xff] %vm183, 0.0
          %186 = vst.msk [vmem:[#allocation4] sm:$0xff] %vm183, 0.0
        $region32: #{tpu_custom_call.1} parent=27 // pred_fallthru
          _
        %v187 = vld [vmem:[%s174] sm:$0xff]
        %v188 = vld [vmem:[%s178] sm:$0xff]
        %s189 = smul.u32 %s21, 128
        %v190 = vlaneseq
        %v191 = vand.u32 %v190, 127
        %v192 = vstv %s189
        %v193 = vadd.s32 %v192, %v191
        %194 = vset.pattern.permute.xlu0 0
        %195 = vperm.xlu0 %194, %v188
        %v196 = vpop.permute.xlu0 %195
        %vm197 = vcmp.eq.s32.totalorder %v193, %v196
        %v198 = vsel %vm197, 0.9007813, 0.00078125
        %v199 = vld [vmem:[#allocation2] sm:$0xff]
        %200 = vmax.xlane.f32.xlu0 %v187
        %v201 = vpop.xlane.xlu0 %200
        %v202 = vmax.f32 %v199, %v201
        %v203 = vsub.f32 %v199, %v202
        %v204 = vmul.f32 %v203, 1.442695
        %v205 = vpow.pop %v204
        %v206 = vld [vmem:[#allocation3] sm:$0xff]
        %v207 = vmul.f32 %v205, %v206
        %209 = vset.pattern.permute.xlu0 0
        %210 = vperm.xlu0 %209, %v202
        %v211 = vpop.permute.xlu0 %210
        %v213 = vsub.f32 %v187, %v211
        %v214 = vmul.f32 %v213, 1.442695
        %v215 = vpow.pop %v214
        %216 = vadd.xlane.f32.xlu0 %v215
        %v217 = vpop.xlane.xlu0 %216
        %v218 = vadd.f32 %v207, %v217
        %vm219 = vcmask 7168
        %220 = vst.msk [vmem:[#allocation3] sm:$0xff] %vm219, %v218
        %v221 = vld [vmem:[#allocation4] sm:$0xff]
        %v222 = vmul.f32 %v187, %v198
        %223 = vadd.xlane.f32.xlu0 %v222
        %v224 = vpop.xlane.xlu0 %223
        %v225 = vadd.f32 %v221, %v224
        %226 = vst.msk [vmem:[#allocation4] sm:$0xff] %vm219, %v225
        %227 = vst.msk [vmem:[#allocation2] sm:$0xff] %vm219, %v202
        // Predicated region
        $region33: #{tpu_custom_call.1} parent=27 // pred_check
          %p228 = pneg %p179
        $region34: #{tpu_custom_call.1} parent=27 // pred_check_branch
          %230 = sbr.rel (%p228) target = $region36
        $region35: #{tpu_custom_call.1} parent=27 // pred_region
          %v231 = vld [vmem:[#allocation2] sm:$0xff]
          %v232 = vld [vmem:[#allocation3] sm:$0xff]
          %v233 = vlog2.pop %v232
          %v234 = vmul.f32 %v233, 0.6931472
          %v235 = vadd.f32 %v231, %v234
          %v236 = vld [vmem:[#allocation4] sm:$0xff]
          %v237 = vsub.f32 %v235, %v236
          %v238 = vsel %vm219, %v237, 0.0
          %239 = vadd.xlane.f32.xlu0 %v238
          %v240 = vpop.xlane.xlu0 %239
          %v241 = vrot.slane %v240, 4
          %v242 = vadd.f32 %v240, %v241
          %v243 = vrot.slane %v242, 2
          %v244 = vadd.f32 %v242, %v243
          %v245 = vrot.slane %v244, 1
          %v246 = vadd.f32 %v244, %v245
          %s247 = vtos %v246
          %v248 = vstv %s247
          %249 = vst [vmem:[%s167] sm:$0xff] %v248
        $region36: #{tpu_custom_call.1} parent=27 // pred_fallthru
          _
        %s250 = sand.u32 %s90, 1
        %s251 = scalar_lea.sflag [#allocation6], %s250
        %s252 = sand.u32 %s90, 1
        %s253 = smul.addr %s252, 8
        %s254 = scalar_lea.vmem [#allocation5], %s253
        // Predicated region
        $region37: #{tpu_custom_call.1} parent=27 // pred_check
          %p255 = pneg %p100
        $region38: #{tpu_custom_call.1} parent=27 // pred_check_branch
          %257 = sbr.rel (%p255) target = $region40
        $region39: #{tpu_custom_call.1} parent=27 // pred_region
          %s259 = ssub.s32 128, 128
          %260 = vsyncadd %s251, %s259
          %s261 = smul.addr %s20, 128
          %s262 = scalar_lea.hbm %s2, %s261
          %s264 = sshll.u32 %s254, 4
          %s265 = int_to_ptr.vmem [resolvable:$true] %s264
          %267 = dma.vmem_to_hbm [thread:$0]  %s265, 128, %s262, %s251
        $region40: #{tpu_custom_call.1} parent=27 // pred_fallthru
          _
      $region28: #{tpu_custom_call.1} parent=5 // pred_fallthru
        _
      %p268 = scmp.le.s32.totalorder 2, %s11
      // Predicated region
      $region41: #{tpu_custom_call.1} parent=5 // pred_check
        %p269 = pneg %p268
      $region42: #{tpu_custom_call.1} parent=5 // pred_check_branch
        %271 = sbr.rel (%p269) target = $region44
      $region43: #{tpu_custom_call.1} parent=5 // pred_region
        %s272 = ssub.s32 %s11, 2
        // Predicated region
        $region45: #{tpu_custom_call.1} parent=43 // pred_check
          %p273 = pneg %p106
        $region46: #{tpu_custom_call.1} parent=43 // pred_check_branch
          %275 = sbr.rel (%p273) target = $region48
        $region47: #{tpu_custom_call.1} parent=43 // pred_region
          %s276 = sand.u32 %s91, 1
          %s277 = scalar_lea.sflag [#allocation6], %s276
          %s278 = sand.u32 %s91, 1
          %s279 = smul.addr %s278, 8
          %s280 = scalar_lea.vmem [#allocation5], %s279
          %281 = dma.done %s277, 128
        $region48: #{tpu_custom_call.1} parent=43 // pred_fallthru
          _
      $region44: #{tpu_custom_call.1} parent=5 // pred_fallthru
        _
    $region6: #{tpu_custom_call.1} parent=1 // loop_footer
      %s15 = sadd.s32 1, %s11
    $region7: #{tpu_custom_call.1} parent=1 // loop_footer_branch
      %10 = sbr.rel target = $region3
    $region8: #{tpu_custom_call.1} parent=1 // loop_exit
      _
    %282 = vsyncpa [#allocation6], 1
    %s283 = scalar_lea.sflag [#allocation6], 1
    %284 = vsyncpa %s283, 1

</llo_original>
